<compile_context>
chip_gen: v6e
topology: v6e:2x2x1
jax: 0.10.0
libtpu: 0.0.40
codegen_flags: <defaults>
</compile_context>

<pallas_src>
import jax
import jax.numpy as jnp
from jax import lax
from jax.experimental import pallas as pl

SCALE = 2.0343017578125e-05
DROP_P = 0.3
KEEP_SCALE = 1.0 / (1.0 - DROP_P)
# keep iff bits >= DROP_P * 2**32  =>  P(keep) = 1 - DROP_P
DROP_THRESHOLD = int(round(DROP_P * (2.0 ** 32)))


def sdpa_dropout_kernel(q_ref, k_ref, v_ref, bits_ref, o_ref):
    # All B*H heads handled in one step: refs are (BH, S, D) / (BH, S, S).
    q = q_ref[...].astype(jnp.float32) * SCALE            # scale folded into q
    k = k_ref[...].astype(jnp.float32)
    v = v_ref[...].astype(jnp.float32)

    # scores = q @ k^T, batched over heads, contracting the last dims
    # (no materialized transpose).
    s = lax.dot_general(q, k, (((2,), (2,)), ((0,), (0,))),
                        preferred_element_type=jnp.float32)    # (BH, S, S)

    # numerically stable softmax over the last dim
    m = jnp.max(s, axis=-1, keepdims=True)
    e = jnp.exp(s - m)
    denom = jnp.sum(e, axis=-1, keepdims=True)                 # (BH, S, 1)
    # one reciprocal per row; dropout rescale 1/(1-p) folded in
    p = e * (KEEP_SCALE / denom)

    # dropout(p=0.3): integer compare against pre-generated uniform bits
    keep = bits_ref[...] >= jnp.uint32(DROP_THRESHOLD)         # (BH, S, S)
    p = jnp.where(keep, p, 0.0)

    # out = dropout(softmax(q k^T)) @ v, batched over heads
    o = lax.dot_general(p, v, (((2,), (1,)), ((0,), (0,))),
                        preferred_element_type=jnp.float32)    # (BH, S, D)
    o_ref[...] = o.astype(o_ref.dtype)


def attention_dropout_matmul(qk, x1, dropout_key):
    """qk (stand-in for mul_3) and x1: (B, H, S, D) float32 -> (B, H, S, D)."""
    B, H, S, D = qk.shape
    BH = B * H
    qf = qk.reshape(BH, S, D)
    vf = x1.reshape(BH, S, D)
    bits = jax.random.bits(dropout_key, (BH, S, S), dtype=jnp.uint32)

    out = pl.pallas_call(
        sdpa_dropout_kernel,
        out_shape=jax.ShapeDtypeStruct((BH, S, D), x1.dtype),
        # No grid: the whole (tiny) problem is one kernel invocation with
        # full-extent VMEM blocks, avoiding per-grid-step overhead and
        # sub-(8,128) block tiling.
    )(qf, qf, vf, bits)   # q and k are the SAME tensor (mul_3 @ mul_3^T)
    return out.reshape(B, H, S, D)


if __name__ == "__main__":
    key = jax.random.PRNGKey(0)
    k_qk, k_x, k_drop = jax.random.split(key, 3)

    B, H, S, D = 1, 2, 4, 4
    # deterministic stand-in for the module's synthetic "mul_3" tensor
    qk = jax.random.normal(k_qk, (B, H, S, D), dtype=jnp.float32)
    # forward input x1 (the "value" operand of the final matmul)
    x1 = jax.random.normal(k_x, (B, H, S, D), dtype=jnp.float32)

    out = attention_dropout_matmul(qk, x1, k_drop)
    jax.block_until_ready(out)
    assert out.shape == (B, H, S, D)

    # pure-JAX reference (same dropout bits -> deterministic comparison)
    bits = jax.random.bits(k_drop, (B * H, S, S), dtype=jnp.uint32)
    qf = qk.reshape(B * H, S, D).astype(jnp.float32)
    vf = x1.reshape(B * H, S, D).astype(jnp.float32)
    s_ref = jnp.einsum("bqd,bkd->bqk", qf, qf) * SCALE
    p_ref = jax.nn.softmax(s_ref, axis=-1)
    keep = bits >= jnp.uint32(DROP_THRESHOLD)
    p_ref = jnp.where(keep, p_ref * KEEP_SCALE, 0.0)
    ref = jnp.einsum("bqk,bkd->bqd", p_ref, vf).reshape(B, H, S, D)
    assert jnp.allclose(out, ref, rtol=1e-3, atol=1e-3)

    print("KERNEL_OK")
</pallas_src>

<mosaic_0001>
module attributes {stable_mosaic.version = 11 : i64} {
  func.func @sdpa_dropout_kernel(%arg0: memref<2x4x4xf32, #tpu.memory_space<vmem>>, %arg1: memref<2x4x4xf32, #tpu.memory_space<vmem>>, %arg2: memref<2x4x4xf32, #tpu.memory_space<vmem>>, %arg3: memref<2x4x4xi32, #tpu.memory_space<vmem>>, %arg4: memref<2x4x4xf32, #tpu.memory_space<vmem>>) attributes {dimension_semantics = [], scalar_prefetch = 0 : i64, scratch_operands = 0 : i64, tpu.core_type = #tpu.core_type<tc>} {
    %c0 = arith.constant 0 : index
    %c0_0 = arith.constant 0 : index
    %c0_1 = arith.constant 0 : index
    %0 = vector.load %arg0[%c0, %c0_0, %c0_1] : memref<2x4x4xf32, #tpu.memory_space<vmem>>, vector<2x4x4xf32>
    %cst = arith.constant 2.03430172E-5 : f32
    %1 = vector.broadcast %cst : f32 to vector<2x4x4xf32>
    %2 = arith.mulf %0, %1 : vector<2x4x4xf32>
    %c0_2 = arith.constant 0 : index
    %c0_3 = arith.constant 0 : index
    %c0_4 = arith.constant 0 : index
    %3 = vector.load %arg1[%c0_2, %c0_3, %c0_4] : memref<2x4x4xf32, #tpu.memory_space<vmem>>, vector<2x4x4xf32>
    %c0_5 = arith.constant 0 : index
    %c0_6 = arith.constant 0 : index
    %c0_7 = arith.constant 0 : index
    %4 = vector.load %arg2[%c0_5, %c0_6, %c0_7] : memref<2x4x4xf32, #tpu.memory_space<vmem>>, vector<2x4x4xf32>
    %cst_8 = arith.constant dense<0.000000e+00> : vector<2x4x4xf32>
    %5 = tpu.matmul %2, %3, %cst_8 {dimension_numbers = #tpu.dot_dimension_numbers<[2], [2], [1], [1], [0, 0, 0, 1, 1, 1], [0], [0]>} : vector<2x4x4xf32>, vector<2x4x4xf32>, vector<2x4x4xf32> -> vector<2x4x4xf32>
    %cst_9 = arith.constant dense<0xFF800000> : vector<2x4xf32>
    %6 = vector.multi_reduction <maximumf>, %5, %cst_9 [2] : vector<2x4x4xf32> to vector<2x4xf32>
    %7 = vector.shape_cast %6 : vector<2x4xf32> to vector<2x4x1xf32>
    %8 = vector.broadcast %7 : vector<2x4x1xf32> to vector<2x4x4xf32>
    %9 = arith.subf %5, %8 : vector<2x4x4xf32>
    %10 = math.exp %9 : vector<2x4x4xf32>
    %cst_10 = arith.constant dense<0.000000e+00> : vector<2x4xf32>
    %11 = vector.multi_reduction <add>, %10, %cst_10 [2] : vector<2x4x4xf32> to vector<2x4xf32>
    %12 = vector.shape_cast %11 : vector<2x4xf32> to vector<2x4x1xf32>
    %cst_11 = arith.constant 1.42857146 : f32
    %13 = vector.broadcast %cst_11 : f32 to vector<2x4x1xf32>
    %14 = arith.divf %13, %12 : vector<2x4x1xf32>
    %15 = vector.broadcast %14 : vector<2x4x1xf32> to vector<2x4x4xf32>
    %16 = arith.mulf %10, %15 : vector<2x4x4xf32>
    %c0_12 = arith.constant 0 : index
    %c0_13 = arith.constant 0 : index
    %c0_14 = arith.constant 0 : index
    %17 = vector.load %arg3[%c0_12, %c0_13, %c0_14] : memref<2x4x4xi32, #tpu.memory_space<vmem>>, vector<2x4x4xi32>
    %c1288490189_i32 = arith.constant 1288490189 : i32
    %18 = vector.broadcast %c1288490189_i32 : i32 to vector<2x4x4xi32>
    %19 = arith.cmpi uge, %17, %18 : vector<2x4x4xi32>
    %cst_15 = arith.constant 0.000000e+00 : f32
    %20 = vector.broadcast %cst_15 : f32 to vector<2x4x4xf32>
    %21 = arith.select %19, %16, %20 : vector<2x4x4xi1>, vector<2x4x4xf32>
    %cst_16 = arith.constant dense<0.000000e+00> : vector<2x4x4xf32>
    %22 = tpu.matmul %21, %4, %cst_16 {dimension_numbers = #tpu.dot_dimension_numbers<[2], [1], [1], [2], [0, 0, 0, 1, 1, 2], [0], [0]>} : vector<2x4x4xf32>, vector<2x4x4xf32>, vector<2x4x4xf32> -> vector<2x4x4xf32>
    %c0_17 = arith.constant 0 : index
    %c0_18 = arith.constant 0 : index
    %c0_19 = arith.constant 0 : index
    %23 = vector.load %arg4[%c0_17, %c0_18, %c0_19] : memref<2x4x4xf32, #tpu.memory_space<vmem>>, vector<2x4x4xf32>
    tpu.vector_store %arg4[%c0_17, %c0_18, %c0_19], %22 {strides = array<i32>} : memref<2x4x4xf32, #tpu.memory_space<vmem>>, vector<2x4x4xf32>,
    return
  }
}

</mosaic_0001>

<llo_original>
// kernel: tpu_custom_call.1
$region0: #{tpu_custom_call.1}
  #allocation0 [shape = 'u32[]', space=smem, size = 0x4, offset = 0x4, fixed_abs, tag = 'smem constant byte address 0x4 - core index']
  #allocation1 [shape = 'u32[144,128]{1,0:T(1,128)}', space=vmem, size = 0x12000, scoped, tag = 'internal scratch']
  %s0 = inlined_call_operand.hbm [shape: f32[2,4,4], index: 0, kind: input, shape index: {}]
  %s1 = inlined_call_operand.hbm [shape: f32[2,4,4], index: 1, kind: input, shape index: {}]
  %s2 = inlined_call_operand.hbm [shape: f32[2,4,4], index: 2, kind: input, shape index: {}]
  %s3 = inlined_call_operand.hbm [shape: u32[2,4,4], index: 3, kind: input, shape index: {}]
  %s4 = inlined_call_operand.hbm [shape: f32[2,4,4], index: 4, kind: output, shape index: {}]
  %s5 = sld [smem:[#allocation0]]
  $region42: #{tpu_custom_call.1} parent=0
    _
  %s7 = ssub.s32 1, %s5
  %s8 = scalar_select 0, %s7, %s5
  $region1: #{tpu_custom_call.1} parent=0
    #allocation2 [shape = 'u8[4096]{0}', space=vmem, size = 0x1000, scoped, tag = 'input window, operand 0, single buffered']
    #allocation3 [shape = 's32[1]{0}', space=sflag, size = 0x4, scoped, tag = 'scoped memory for tpu_custom_call.1']
    #allocation4 [shape = 's32[1]{0}', space=sflag, size = 0x4, scoped, tag = 'scoped memory for tpu_custom_call.1']
    #allocation5 [shape = 'u8[4096]{0}', space=vmem, size = 0x1000, scoped, tag = 'input window, operand 1, single buffered']
    #allocation6 [shape = 's32[1]{0}', space=sflag, size = 0x4, scoped, tag = 'scoped memory for tpu_custom_call.1']
    #allocation7 [shape = 'u8[4096]{0}', space=vmem, size = 0x1000, scoped, tag = 'input window, operand 2, single buffered']
    #allocation8 [shape = 'u8[4096]{0}', space=vmem, size = 0x1000, scoped, tag = 'input window, operand 3, single buffered']
    #allocation9 [shape = 's32[1]{0}', space=sflag, size = 0x4, scoped, tag = 'scoped memory for tpu_custom_call.1']
    #allocation10 [shape = 'u8[4096]{0}', space=vmem, size = 0x1000, scoped, tag = 'output window, operand 0, single buffered']
    %9 = vsyncpa [#allocation3], 0
    %10 = vsyncpa [#allocation6], 0
    %11 = vsyncpa [#allocation9], 0
    %12 = vsyncpa [#allocation4], 0
    // Predicated region
    $region2: #{tpu_custom_call.1} parent=1 // pred_check
      _
    $region3: #{tpu_custom_call.1} parent=1 // pred_check_branch
      %14 = sbr.rel (0) target = $region5
    $region4: #{tpu_custom_call.1} parent=1 // pred_region
      %s16 = ssub.s32 128, 128
      %17 = vsyncadd [#allocation3], %s16
      %s18 = sshll.u32 [#allocation2], 4
      %s19 = int_to_ptr.vmem [resolvable:$true] %s18
      %24 = dma.hbm_to_vmem [thread:$0]  %s0, 128, %s19, [#allocation3], 64, 64, 4
    $region5: #{tpu_custom_call.1} parent=1 // pred_fallthru
      _
    // Predicated region
    $region6: #{tpu_custom_call.1} parent=1 // pred_check
      _
    $region7: #{tpu_custom_call.1} parent=1 // pred_check_branch
      %26 = sbr.rel (0) target = $region9
    $region8: #{tpu_custom_call.1} parent=1 // pred_region
      %s28 = ssub.s32 128, 128
      %29 = vsyncadd [#allocation6], %s28
      %s30 = sshll.u32 [#allocation5], 4
      %s31 = int_to_ptr.vmem [resolvable:$true] %s30
      %36 = dma.hbm_to_vmem [thread:$0]  %s1, 128, %s31, [#allocation6], 64, 64, 4
    $region9: #{tpu_custom_call.1} parent=1 // pred_fallthru
      _
    // Predicated region
    $region10: #{tpu_custom_call.1} parent=1 // pred_check
      _
    $region11: #{tpu_custom_call.1} parent=1 // pred_check_branch
      %38 = sbr.rel (0) target = $region13
    $region12: #{tpu_custom_call.1} parent=1 // pred_region
      %s40 = ssub.s32 128, 128
      %41 = vsyncadd [#allocation6], %s40
      %s42 = sshll.u32 [#allocation7], 4
      %s43 = int_to_ptr.vmem [resolvable:$true] %s42
      %48 = dma.hbm_to_vmem [thread:$0]  %s2, 128, %s43, [#allocation6], 64, 64, 4
    $region13: #{tpu_custom_call.1} parent=1 // pred_fallthru
      _
    // Predicated region
    $region14: #{tpu_custom_call.1} parent=1 // pred_check
      _
    $region15: #{tpu_custom_call.1} parent=1 // pred_check_branch
      %50 = sbr.rel (0) target = $region17
    $region16: #{tpu_custom_call.1} parent=1 // pred_region
      %s52 = ssub.s32 128, 128
      %53 = vsyncadd [#allocation9], %s52
      %s54 = sshll.u32 [#allocation8], 4
      %s55 = int_to_ptr.vmem [resolvable:$true] %s54
      %60 = dma.hbm_to_vmem [thread:$0]  %s3, 128, %s55, [#allocation9], 64, 64, 4
    $region17: #{tpu_custom_call.1} parent=1 // pred_fallthru
      _
    // Predicated region
    $region18: #{tpu_custom_call.1} parent=1 // pred_check
      _
    $region19: #{tpu_custom_call.1} parent=1 // pred_check_branch
      %62 = sbr.rel (0) target = $region21
    $region20: #{tpu_custom_call.1} parent=1 // pred_region
      %63 = dma.done [#allocation3], 128
    $region21: #{tpu_custom_call.1} parent=1 // pred_fallthru
      _
    // Predicated region
    $region22: #{tpu_custom_call.1} parent=1 // pred_check
      _
    $region23: #{tpu_custom_call.1} parent=1 // pred_check_branch
      %65 = sbr.rel (0) target = $region25
    $region24: #{tpu_custom_call.1} parent=1 // pred_region
      %66 = dma.done [#allocation6], 128
    $region25: #{tpu_custom_call.1} parent=1 // pred_fallthru
      _
    // Predicated region
    $region26: #{tpu_custom_call.1} parent=1 // pred_check
      _
    $region27: #{tpu_custom_call.1} parent=1 // pred_check_branch
      %68 = sbr.rel (0) target = $region29
    $region28: #{tpu_custom_call.1} parent=1 // pred_region
      %69 = dma.done [#allocation6], 128
    $region29: #{tpu_custom_call.1} parent=1 // pred_fallthru
      _
    // Predicated region
    $region30: #{tpu_custom_call.1} parent=1 // pred_check
      _
    $region31: #{tpu_custom_call.1} parent=1 // pred_check_branch
      %71 = sbr.rel (0) target = $region33
    $region32: #{tpu_custom_call.1} parent=1 // pred_region
      %72 = dma.done [#allocation9], 128
    $region33: #{tpu_custom_call.1} parent=1 // pred_fallthru
      _
    %v73 = vld [vmem:[#allocation2] sm:$0xf]
    %v74 = vld [vmem:[#allocation2 + $0x4] sm:$0xf]
    %v75 = vmul.f32 %v73, 2.0343017e-05
    %v76 = vmul.f32 %v74, 2.0343017e-05
    %v77 = vld [vmem:[#allocation5] sm:$0xf]
    %v78 = vld [vmem:[#allocation5 + $0x4] sm:$0xf]
    %v79 = vld [vmem:[#allocation7] sm:$0xf]
    %v80 = vld [vmem:[#allocation7 + $0x4] sm:$0xf]
    %vm81 = vcmask 31744
    %v83 = vsel %vm81, %v75, 0
    %v86 = vsel %vm81, %v77, 0
    %88 = vmatprep.subr.mxu0 0.0
    %89 = vmatpush1.xpose.msra.mxu0 0.0
    %90 = vmatprep.subr.mxu0 0.0
    %91 = vmatpush1.xpose.msra.mxu0 0.0
    %92 = vmatprep.subr.mxu0 0.0
    %93 = vmatpush1.xpose.msra.mxu0 0.0
    %94 = vmatprep.subr.mxu0 0.0
    %95 = vmatpush1.xpose.msra.mxu0 0.0
    %96 = vmatprep.subr.mxu0 0.0
    %97 = vmatpush1.xpose.msra.mxu0 0.0
    %98 = vmatprep.subr.mxu0 0.0
    %99 = vmatpush1.xpose.msra.mxu0 0.0
    %100 = vmatprep.subr.mxu0 0.0
    %101 = vmatpush1.xpose.msra.mxu0 0.0
    %102 = vmatprep.subr.mxu0 0.0
    %103 = vmatpush1.xpose.msra.mxu0 0.0
    %104 = vmatprep.subr.mxu0 0.0
    %105 = vmatpush1.xpose.msra.mxu0 0.0
    %106 = vmatprep.subr.mxu0 0.0
    %107 = vmatpush1.xpose.msra.mxu0 0.0
    %108 = vmatprep.subr.mxu0 0.0
    %109 = vmatpush1.xpose.msra.mxu0 0.0
    %110 = vmatprep.subr.mxu0 0.0
    %111 = vmatpush1.xpose.msra.mxu0 0.0
    %112 = vmatprep.subr.mxu0 0.0
    %113 = vmatpush1.xpose.msra.mxu0 0.0
    %114 = vmatprep.subr.mxu0 0.0
    %115 = vmatpush1.xpose.msra.mxu0 0.0
    %116 = vmatprep.subr.mxu0 0.0
    %117 = vmatpush1.xpose.msra.mxu0 0.0
    %118 = vmatprep.subr.mxu0 0.0
    %119 = vmatpush1.xpose.msra.mxu0 %v86
    %120 = vmatprep.subr.mxu0 0.0
    %121 = vmatpush2.xpose.msra.mxu0 0.0
    %122 = vmatprep.subr.mxu0 0.0
    %123 = vmatpush2.xpose.msra.mxu0 0.0
    %124 = vmatprep.subr.mxu0 0.0
    %125 = vmatpush2.xpose.msra.mxu0 0.0
    %126 = vmatprep.subr.mxu0 0.0
    %127 = vmatpush2.xpose.msra.mxu0 0.0
    %128 = vmatprep.subr.mxu0 0.0
    %129 = vmatpush2.xpose.msra.mxu0 0.0
    %130 = vmatprep.subr.mxu0 0.0
    %131 = vmatpush2.xpose.msra.mxu0 0.0
    %132 = vmatprep.subr.mxu0 0.0
    %133 = vmatpush2.xpose.msra.mxu0 0.0
    %134 = vmatprep.subr.mxu0 0.0
    %135 = vmatpush2.xpose.msra.mxu0 0.0
    %136 = vmatprep.subr.mxu0 0.0
    %137 = vmatpush2.xpose.msra.mxu0 0.0
    %138 = vmatprep.subr.mxu0 0.0
    %139 = vmatpush2.xpose.msra.mxu0 0.0
    %140 = vmatprep.subr.mxu0 0.0
    %141 = vmatpush2.xpose.msra.mxu0 0.0
    %142 = vmatprep.subr.mxu0 0.0
    %143 = vmatpush2.xpose.msra.mxu0 0.0
    %144 = vmatprep.subr.mxu0 0.0
    %145 = vmatpush2.xpose.msra.mxu0 0.0
    %146 = vmatprep.subr.mxu0 0.0
    %147 = vmatpush2.xpose.msra.mxu0 0.0
    %148 = vmatprep.subr.mxu0 0.0
    %149 = vmatpush2.xpose.msra.mxu0 0.0
    %150 = vmatprep.subr.mxu0 0.0
    %151 = vmatpush2.xpose.msra.mxu0 0.0
    %152 = vmatprep.mubr.f32.mxu0 0.0
    %153 = vmatmul.mubr.f32.gmra.mxu0 %v83
    %v154 = vpop.f32.mrf.mxu0
    %v155 = vadd.f32 0.0, %v154
    %v156 = vpop.f32.mrf.mxu0
    %157 = vdwg.mxu0
    %v159 = vsel %vm81, %v76, 0
    %v162 = vsel %vm81, %v78, 0
    %164 = vmatprep.subr.mxu0 0.0
    %165 = vmatpush1.xpose.msra.mxu0 0.0
    %166 = vmatprep.subr.mxu0 0.0
    %167 = vmatpush1.xpose.msra.mxu0 0.0
    %168 = vmatprep.subr.mxu0 0.0
    %169 = vmatpush1.xpose.msra.mxu0 0.0
    %170 = vmatprep.subr.mxu0 0.0
    %171 = vmatpush1.xpose.msra.mxu0 0.0
    %172 = vmatprep.subr.mxu0 0.0
    %173 = vmatpush1.xpose.msra.mxu0 0.0
    %174 = vmatprep.subr.mxu0 0.0
    %175 = vmatpush1.xpose.msra.mxu0 0.0
    %176 = vmatprep.subr.mxu0 0.0
    %177 = vmatpush1.xpose.msra.mxu0 0.0
    %178 = vmatprep.subr.mxu0 0.0
    %179 = vmatpush1.xpose.msra.mxu0 0.0
    %180 = vmatprep.subr.mxu0 0.0
    %181 = vmatpush1.xpose.msra.mxu0 0.0
    %182 = vmatprep.subr.mxu0 0.0
    %183 = vmatpush1.xpose.msra.mxu0 0.0
    %184 = vmatprep.subr.mxu0 0.0
    %185 = vmatpush1.xpose.msra.mxu0 0.0
    %186 = vmatprep.subr.mxu0 0.0
    %187 = vmatpush1.xpose.msra.mxu0 0.0
    %188 = vmatprep.subr.mxu0 0.0
    %189 = vmatpush1.xpose.msra.mxu0 0.0
    %190 = vmatprep.subr.mxu0 0.0
    %191 = vmatpush1.xpose.msra.mxu0 0.0
    %192 = vmatprep.subr.mxu0 0.0
    %193 = vmatpush1.xpose.msra.mxu0 0.0
    %194 = vmatprep.subr.mxu0 0.0
    %195 = vmatpush1.xpose.msra.mxu0 %v162
    %196 = vmatprep.subr.mxu0 0.0
    %197 = vmatpush2.xpose.msra.mxu0 0.0
    %198 = vmatprep.subr.mxu0 0.0
    %199 = vmatpush2.xpose.msra.mxu0 0.0
    %200 = vmatprep.subr.mxu0 0.0
    %201 = vmatpush2.xpose.msra.mxu0 0.0
    %202 = vmatprep.subr.mxu0 0.0
    %203 = vmatpush2.xpose.msra.mxu0 0.0
    %204 = vmatprep.subr.mxu0 0.0
    %205 = vmatpush2.xpose.msra.mxu0 0.0
    %206 = vmatprep.subr.mxu0 0.0
    %207 = vmatpush2.xpose.msra.mxu0 0.0
    %208 = vmatprep.subr.mxu0 0.0
    %209 = vmatpush2.xpose.msra.mxu0 0.0
    %210 = vmatprep.subr.mxu0 0.0
    %211 = vmatpush2.xpose.msra.mxu0 0.0
    %212 = vmatprep.subr.mxu0 0.0
    %213 = vmatpush2.xpose.msra.mxu0 0.0
    %214 = vmatprep.subr.mxu0 0.0
    %215 = vmatpush2.xpose.msra.mxu0 0.0
    %216 = vmatprep.subr.mxu0 0.0
    %217 = vmatpush2.xpose.msra.mxu0 0.0
    %218 = vmatprep.subr.mxu0 0.0
    %219 = vmatpush2.xpose.msra.mxu0 0.0
    %220 = vmatprep.subr.mxu0 0.0
    %221 = vmatpush2.xpose.msra.mxu0 0.0
    %222 = vmatprep.subr.mxu0 0.0
    %223 = vmatpush2.xpose.msra.mxu0 0.0
    %224 = vmatprep.subr.mxu0 0.0
    %225 = vmatpush2.xpose.msra.mxu0 0.0
    %226 = vmatprep.subr.mxu0 0.0
    %227 = vmatpush2.xpose.msra.mxu0 0.0
    %228 = vmatprep.mubr.f32.mxu0 0.0
    %229 = vmatmul.mubr.f32.gmra.mxu0 %v159
    %v230 = vpop.f32.mrf.mxu0
    %v231 = vadd.f32 0.0, %v230
    %v232 = vpop.f32.mrf.mxu0
    %233 = vdwg.mxu0
    %vm234 = vcmask 27648
    %v235 = vsel %vm234, %v155, -inf
    %236 = vmax.xlane.f32.xlu0 %v235
    %v237 = vpop.xlane.xlu0 %236
    %v238 = vsel %vm234, %v231, -inf
    %239 = vmax.xlane.f32.xlu0 %v238
    %v240 = vpop.xlane.xlu0 %239
    %v241 = vsub.f32 %v155, %v237
    %v242 = vsub.f32 %v231, %v240
    %v243 = vmul.f32 %v241, 1.442695
    %v244 = vpow.pop %v243
    %v245 = vmul.f32 %v242, 1.442695
    %v246 = vpow.pop %v245
    %v247 = vsel %vm234, %v244, 0.0
    %248 = vadd.xlane.f32.xlu0 %v247
    %v249 = vpop.xlane.xlu0 %248
    %v250 = vsel %vm234, %v246, 0.0
    %251 = vadd.xlane.f32.xlu0 %v250
    %v252 = vpop.xlane.xlu0 %251
    %v253 = vrcp.pop %v249
    %v254 = vmul.f32 1.4285715, %v253
    %v255 = vrcp.pop %v252
    %v256 = vmul.f32 1.4285715, %v255
    %v257 = vmul.f32 %v244, %v254
    %v258 = vmul.f32 %v246, %v256
    %v259 = vld [vmem:[#allocation8] sm:$0xf]
    %v260 = vld [vmem:[#allocation8 + $0x4] sm:$0xf]
    %vm261 = vcmp.ge.u32.totalorder %v259, 1288490189
    %vm262 = vcmp.ge.u32.totalorder %v260, 1288490189
    %v263 = vsel %vm261, %v257, 0.0
    %v264 = vsel %vm262, %v258, 0.0
    %v266 = vsel %vm81, %v263, 0
    %vm268 = vcmask 1043456
    %v270 = vsel %vm268, %v79, 0
    %272 = vmatprep.subr.mxu0 0.0
    %273 = vmatpush1.msra.mxu0 0.0
    %274 = vmatprep.subr.mxu0 0.0
    %275 = vmatpush1.msra.mxu0 0.0
    %276 = vmatprep.subr.mxu0 0.0
    %277 = vmatpush1.msra.mxu0 0.0
    %278 = vmatprep.subr.mxu0 0.0
    %279 = vmatpush1.msra.mxu0 0.0
    %280 = vmatprep.subr.mxu0 0.0
    %281 = vmatpush1.msra.mxu0 0.0
    %282 = vmatprep.subr.mxu0 0.0
    %283 = vmatpush1.msra.mxu0 0.0
    %284 = vmatprep.subr.mxu0 0.0
    %285 = vmatpush1.msra.mxu0 0.0
    %286 = vmatprep.subr.mxu0 0.0
    %287 = vmatpush1.msra.mxu0 0.0
    %288 = vmatprep.subr.mxu0 0.0
    %289 = vmatpush1.msra.mxu0 0.0
    %290 = vmatprep.subr.mxu0 0.0
    %291 = vmatpush1.msra.mxu0 0.0
    %292 = vmatprep.subr.mxu0 0.0
    %293 = vmatpush1.msra.mxu0 0.0
    %294 = vmatprep.subr.mxu0 0.0
    %295 = vmatpush1.msra.mxu0 0.0
    %296 = vmatprep.subr.mxu0 0.0
    %297 = vmatpush1.msra.mxu0 0.0
    %298 = vmatprep.subr.mxu0 0.0
    %299 = vmatpush1.msra.mxu0 0.0
    %300 = vmatprep.subr.mxu0 0.0
    %301 = vmatpush1.msra.mxu0 0.0
    %302 = vmatprep.subr.mxu0 0.0
    %303 = vmatpush1.msra.mxu0 %v270
    %304 = vmatprep.subr.mxu0 0.0
    %305 = vmatpush2.msra.mxu0 0.0
    %306 = vmatprep.subr.mxu0 0.0
    %307 = vmatpush2.msra.mxu0 0.0
    %308 = vmatprep.subr.mxu0 0.0
    %309 = vmatpush2.msra.mxu0 0.0
    %310 = vmatprep.subr.mxu0 0.0
    %311 = vmatpush2.msra.mxu0 0.0
    %312 = vmatprep.subr.mxu0 0.0
    %313 = vmatpush2.msra.mxu0 0.0
    %314 = vmatprep.subr.mxu0 0.0
    %315 = vmatpush2.msra.mxu0 0.0
    %316 = vmatprep.subr.mxu0 0.0
    %317 = vmatpush2.msra.mxu0 0.0
    %318 = vmatprep.subr.mxu0 0.0
    %319 = vmatpush2.msra.mxu0 0.0
    %320 = vmatprep.subr.mxu0 0.0
    %321 = vmatpush2.msra.mxu0 0.0
    %322 = vmatprep.subr.mxu0 0.0
    %323 = vmatpush2.msra.mxu0 0.0
    %324 = vmatprep.subr.mxu0 0.0
    %325 = vmatpush2.msra.mxu0 0.0
    %326 = vmatprep.subr.mxu0 0.0
    %327 = vmatpush2.msra.mxu0 0.0
    %328 = vmatprep.subr.mxu0 0.0
    %329 = vmatpush2.msra.mxu0 0.0
    %330 = vmatprep.subr.mxu0 0.0
    %331 = vmatpush2.msra.mxu0 0.0
    %332 = vmatprep.subr.mxu0 0.0
    %333 = vmatpush2.msra.mxu0 0.0
    %334 = vmatprep.subr.mxu0 0.0
    %335 = vmatpush2.msra.mxu0 0.0
    %336 = vmatprep.mubr.f32.mxu0 0.0
    %337 = vmatmul.mubr.f32.gmra.mxu0 %v266
    %v338 = vpop.f32.mrf.mxu0
    %v339 = vadd.f32 0.0, %v338
    %v340 = vpop.f32.mrf.mxu0
    %341 = vdwg.mxu0
    %v343 = vsel %vm81, %v264, 0
    %v346 = vsel %vm268, %v80, 0
    %348 = vmatprep.subr.mxu0 0.0
    %349 = vmatpush1.msra.mxu0 0.0
    %350 = vmatprep.subr.mxu0 0.0
    %351 = vmatpush1.msra.mxu0 0.0
    %352 = vmatprep.subr.mxu0 0.0
    %353 = vmatpush1.msra.mxu0 0.0
    %354 = vmatprep.subr.mxu0 0.0
    %355 = vmatpush1.msra.mxu0 0.0
    %356 = vmatprep.subr.mxu0 0.0
    %357 = vmatpush1.msra.mxu0 0.0
    %358 = vmatprep.subr.mxu0 0.0
    %359 = vmatpush1.msra.mxu0 0.0
    %360 = vmatprep.subr.mxu0 0.0
    %361 = vmatpush1.msra.mxu0 0.0
    %362 = vmatprep.subr.mxu0 0.0
    %363 = vmatpush1.msra.mxu0 0.0
    %364 = vmatprep.subr.mxu0 0.0
    %365 = vmatpush1.msra.mxu0 0.0
    %366 = vmatprep.subr.mxu0 0.0
    %367 = vmatpush1.msra.mxu0 0.0
    %368 = vmatprep.subr.mxu0 0.0
    %369 = vmatpush1.msra.mxu0 0.0
    %370 = vmatprep.subr.mxu0 0.0
    %371 = vmatpush1.msra.mxu0 0.0
    %372 = vmatprep.subr.mxu0 0.0
    %373 = vmatpush1.msra.mxu0 0.0
    %374 = vmatprep.subr.mxu0 0.0
    %375 = vmatpush1.msra.mxu0 0.0
    %376 = vmatprep.subr.mxu0 0.0
    %377 = vmatpush1.msra.mxu0 0.0
    %378 = vmatprep.subr.mxu0 0.0
    %379 = vmatpush1.msra.mxu0 %v346
    %380 = vmatprep.subr.mxu0 0.0
    %381 = vmatpush2.msra.mxu0 0.0
    %382 = vmatprep.subr.mxu0 0.0
    %383 = vmatpush2.msra.mxu0 0.0
    %384 = vmatprep.subr.mxu0 0.0
    %385 = vmatpush2.msra.mxu0 0.0
    %386 = vmatprep.subr.mxu0 0.0
    %387 = vmatpush2.msra.mxu0 0.0
    %388 = vmatprep.subr.mxu0 0.0
    %389 = vmatpush2.msra.mxu0 0.0
    %390 = vmatprep.subr.mxu0 0.0
    %391 = vmatpush2.msra.mxu0 0.0
    %392 = vmatprep.subr.mxu0 0.0
    %393 = vmatpush2.msra.mxu0 0.0
    %394 = vmatprep.subr.mxu0 0.0
    %395 = vmatpush2.msra.mxu0 0.0
    %396 = vmatprep.subr.mxu0 0.0
    %397 = vmatpush2.msra.mxu0 0.0
    %398 = vmatprep.subr.mxu0 0.0
    %399 = vmatpush2.msra.mxu0 0.0
    %400 = vmatprep.subr.mxu0 0.0
    %401 = vmatpush2.msra.mxu0 0.0
    %402 = vmatprep.subr.mxu0 0.0
    %403 = vmatpush2.msra.mxu0 0.0
    %404 = vmatprep.subr.mxu0 0.0
    %405 = vmatpush2.msra.mxu0 0.0
    %406 = vmatprep.subr.mxu0 0.0
    %407 = vmatpush2.msra.mxu0 0.0
    %408 = vmatprep.subr.mxu0 0.0
    %409 = vmatpush2.msra.mxu0 0.0
    %410 = vmatprep.subr.mxu0 0.0
    %411 = vmatpush2.msra.mxu0 0.0
    %412 = vmatprep.mubr.f32.mxu0 0.0
    %413 = vmatmul.mubr.f32.gmra.mxu0 %v343
    %v414 = vpop.f32.mrf.mxu0
    %v415 = vadd.f32 0.0, %v414
    %v416 = vpop.f32.mrf.mxu0
    %417 = vdwg.mxu0
    %418 = vst.msk [vmem:[#allocation10] sm:$0xf] %vm234, %v339
    %419 = vst.msk [vmem:[#allocation10 + $0x4] sm:$0xf] %vm234, %v415
    // Predicated region
    $region34: #{tpu_custom_call.1} parent=1 // pred_check
      _
    $region35: #{tpu_custom_call.1} parent=1 // pred_check_branch
      %421 = sbr.rel (0) target = $region37
    $region36: #{tpu_custom_call.1} parent=1 // pred_region
      %s423 = ssub.s32 128, 128
      %424 = vsyncadd [#allocation4], %s423
      %s425 = sshll.u32 [#allocation10], 4
      %s426 = int_to_ptr.vmem [resolvable:$true] %s425
      %431 = dma.vmem_to_hbm [thread:$0]  %s426, 128, %s4, [#allocation4], 64, 64, 4
    $region37: #{tpu_custom_call.1} parent=1 // pred_fallthru
      _
    // Predicated region
    $region38: #{tpu_custom_call.1} parent=1 // pred_check
      _
    $region39: #{tpu_custom_call.1} parent=1 // pred_check_branch
      %433 = sbr.rel (0) target = $region41
    $region40: #{tpu_custom_call.1} parent=1 // pred_region
      %434 = dma.done [#allocation4], 128
    $region41: #{tpu_custom_call.1} parent=1 // pred_fallthru
      _
    %435 = vsyncpa [#allocation3], 1
    %436 = vsyncpa [#allocation6], 1
    %437 = vsyncpa [#allocation9], 1
    %438 = vsyncpa [#allocation4], 1

</llo_original>
